<compile_context>
chip_gen: v5e
topology: v5e:2x2
jax: 0.10.0
libtpu: 0.0.40
codegen_flags: <defaults>
</compile_context>

<pallas_src>
import numpy as np
import jax
import jax.numpy as jnp
from jax.experimental import pallas as pl
from jax.experimental.pallas import tpu as pltpu


def _detect_kernel(feat_ref, w_ref, consts_ref, grid_ref, logits_ref, dec_ref):
    """One (batch, HW-tile) block: bf16 1x1 conv (MXU) + sigmoid + box decode."""
    f = feat_ref[0].astype(jnp.bfloat16)        # (cin, T)   T = TILE_HW on lanes
    w = w_ref[...]                              # (C, cin)   bf16, C = na*no
    c = consts_ref[...]                         # (C, 6) f32: [bias, P, Q, R, SX, SY]
    bias, P, Q = c[:, 0:1], c[:, 1:2], c[:, 2:3]
    R, SX, SY = c[:, 3:4], c[:, 4:5], c[:, 5:6]
    gx = grid_ref[0:1, :]                       # (1, T)
    gy = grid_ref[1:2, :]

    # 1x1 conv: single bf16 MXU pass, f32 accumulate.
    logits = jnp.dot(w, f, preferred_element_type=jnp.float32) + bias   # (C, T)
    logits_ref[0] = logits.astype(logits_ref.dtype)

    y = jax.nn.sigmoid(logits)                  # EUP (free slot)
    # per-channel selectors SX/SY pick which rows receive the grid offsets
    goff = SX * gx + SY * gy                    # (C, T)
    dec = (P * y + Q) * y + R + goff
    dec_ref[0] = dec.astype(dec_ref.dtype)


def _make_grid_np(nx, ny):
    # Reproduces Detect._make_grid exactly (including its np.meshgrid order and
    # the .view((1,1,ny,nx,2)) memory reinterpretation).
    grid_y, grid_x = np.meshgrid(np.arange(ny), np.arange(nx))
    return np.stack((grid_x, grid_y), 2).astype(np.float32).reshape(1, 1, ny, nx, 2)


def _pick_tile_hw(hw, max_tile=1280, prefer_min_tiles=1):
    """Pick a lane tile for the flattened-HW axis.

    - hw < 128: single full-extent block (allowed when equal to array dim).
    - exact multiple-of-128 divisors preferred (no ragged edge), largest first,
      keeping at least `prefer_min_tiles` grid steps (v7x dual-TC occupancy).
    - otherwise: ragged cdiv grid; pick the tile that maximizes measured
      per-tile HBM efficiency weighted by useful/padded lanes.
    """
    if hw <= 128:
        return hw
    cap = min(max_tile, (hw // 128) * 128)
    exact = [t for t in range(128, cap + 1, 128) if hw % t == 0]
    if exact:
        multi = [t for t in exact if hw // t >= prefer_min_tiles]
        return max(multi) if multi else max(exact)

    def eff(t):   # rough measured tile-size efficiency curve (128->0.29, 512+->0.86)
        return min(0.86, 0.29 + 0.57 * (t - 128) / 384.0)

    def score(t):
        n = -(-hw // t)
        return eff(t) * hw / (n * t)

    return max(range(128, cap + 1, 128), key=score)


def detect_level(feat_nchw, weight, bias, anchors_l, stride, no,
                 max_tile_hw=1280,
                 logits_dtype=jnp.bfloat16, dec_dtype=jnp.bfloat16):
    """One scale of Detect.forward (eval mode).

    feat_nchw : (bs, cin, ny, nx)   NCHW conv input
    weight    : (na*no, cin, 1, 1)  Conv2d 1x1 weight
    bias      : (na*no,)
    anchors_l : (na, 2)
    Returns (x_i, z_i):
      x_i: (bs, na, ny, nx, no) raw logits (the permuted conv output)
      z_i: (bs, na*ny*nx, no)   decoded predictions
    """
    bs, cin, ny, nx = feat_nchw.shape
    na = int(anchors_l.shape[0])
    C = na * no
    HW = ny * nx
    stride = float(stride)

    # If the batch axis already provides parallel grid steps, a single big HW
    # tile per batch is fine; at bs == 1 keep >= 2 HW tiles for dual-TC chips.
    tile_hw = _pick_tile_hw(HW, max_tile_hw,
                            prefer_min_tiles=2 if bs == 1 else 1)
    n_hw_tiles = pl.cdiv(HW, tile_hw)

    feat = feat_nchw.reshape(bs, cin, HW)            # free reshape, stays NCHW
    w = jnp.reshape(weight, (C, cin)).astype(jnp.bfloat16)   # bf16 MXU operand

    # Compact grid offsets (flat memory order of Detect._make_grid): (2, HW).
    g = _make_grid_np(nx, ny).reshape(HW, 2)
    grid_rows = jnp.asarray(np.ascontiguousarray(g.T))       # row 0 = gx, row 1 = gy

    # Per-output-channel decode constants, packed as one (C, 6) array:
    #   dec = (P*y + Q)*y + R + SX*gx + SY*gy, with bias in column 0.
    #   o==0: (2y - 0.5 + gx)*stride   o==1: (2y - 0.5 + gy)*stride
    #   o==2: (2y)^2 * anchor_w        o==3: (2y)^2 * anchor_h      else: y
    anchors_np = np.asarray(anchors_l, np.float32)
    consts_np = np.zeros((C, 6), np.float32)
    consts_np[:, 0] = np.asarray(bias, np.float32).reshape(C)
    for a_i in range(na):
        base = a_i * no
        consts_np[base + 0, 2] = 2.0 * stride    # Q
        consts_np[base + 0, 3] = -0.5 * stride   # R
        consts_np[base + 0, 4] = stride          # SX
        consts_np[base + 1, 2] = 2.0 * stride
        consts_np[base + 1, 3] = -0.5 * stride
        consts_np[base + 1, 5] = stride          # SY
        consts_np[base + 2, 1] = 4.0 * anchors_np[a_i, 0]    # P
        consts_np[base + 3, 1] = 4.0 * anchors_np[a_i, 1]
        consts_np[base + 4:base + no, 2] = 1.0               # Q = 1 -> dec = y
    consts = jnp.asarray(consts_np)

    # Scoped-VMEM estimate (double-buffered pipelined arrays + resident consts);
    # keep >= the 32 MiB v6e/v7x default so small cases never regress, raise
    # past v5e's 16 MiB default for big tiles, cap under v7x physical VMEM.
    isz = lambda dt: int(np.dtype(dt).itemsize)
    est = (2 * cin * tile_hw * isz(feat.dtype)            # feat (double-buffered)
           + 2 * C * cin * 2                              # bf16 weight
           + 2 * (C * 6 * 4 + 2 * tile_hw * 4)            # consts + grid rows
           + 2 * C * tile_hw * isz(logits_dtype)          # logits out (double-buffered)
           + 2 * C * tile_hw * isz(dec_dtype))            # dec out (double-buffered)
    vmem_limit = int(min(48 << 20, max(32 << 20, 1.5 * est + (2 << 20))))

    logits, dec = pl.pallas_call(
        _detect_kernel,
        out_shape=(jax.ShapeDtypeStruct((bs, C, HW), logits_dtype),
                   jax.ShapeDtypeStruct((bs, C, HW), dec_dtype)),
        grid_spec=pltpu.PrefetchScalarGridSpec(
            num_scalar_prefetch=0,
            grid=(bs, n_hw_tiles),
            in_specs=[
                pl.BlockSpec((1, cin, tile_hw), lambda b_, t: (b_, 0, t)),  # feat
                pl.BlockSpec((C, cin), lambda b_, t: (0, 0)),               # weight
                pl.BlockSpec((C, 6), lambda b_, t: (0, 0)),                 # packed consts
                pl.BlockSpec((2, tile_hw), lambda b_, t: (0, t)),           # gx / gy rows
            ],
            out_specs=[
                pl.BlockSpec((1, C, tile_hw), lambda b_, t: (b_, 0, t)),
                pl.BlockSpec((1, C, tile_hw), lambda b_, t: (b_, 0, t)),
            ],
        ),
        compiler_params=pltpu.CompilerParams(
            dimension_semantics=("parallel", "parallel"),
            vmem_limit_bytes=vmem_limit),
    )(feat, w, consts, grid_rows)

    # Reassemble the PyTorch shapes/orderings (pure glue, outside the kernel,
    # now moving bf16 -> half the bytes of the previous f32 transposes).
    x_i = logits.reshape(bs, na, no, ny, nx).transpose(0, 1, 3, 4, 2)
    z_i = dec.reshape(bs, na, no, ny, nx).transpose(0, 1, 3, 4, 2).reshape(bs, na * HW, no)
    return x_i, z_i


def detect_forward(xs, weights, biases, anchors, strides, no):
    """Eval-mode Detect.forward: returns (cat(z, 1), x_list)."""
    x_out, z = [], []
    for i, feat in enumerate(xs):
        x_i, z_i = detect_level(feat, weights[i], biases[i], anchors[i], strides[i], no)
        x_out.append(x_i)
        z.append(z_i)
    return jnp.concatenate(z, axis=1), x_out


# ------------------------- pure-JAX f32 reference ------------------------- #
def _ref_detect_level(feat_nchw, weight, bias, anchors_l, stride, no):
    bs, cin, ny, nx = feat_nchw.shape
    na = anchors_l.shape[0]
    w = jnp.reshape(weight, (na * no, cin))
    conv = jnp.einsum('bchw,oc->bohw', feat_nchw, w) + bias[None, :, None, None]
    x_i = conv.reshape(bs, na, no, ny, nx).transpose(0, 1, 3, 4, 2)
    y = jax.nn.sigmoid(x_i)
    grid = jnp.asarray(_make_grid_np(nx, ny))
    xy = (y[..., 0:2] * 2.0 - 0.5 + grid) * stride
    wh = (y[..., 2:4] * 2.0) ** 2 * jnp.asarray(anchors_l).reshape(1, na, 1, 1, 2)
    yy = jnp.concatenate([xy, wh, y[..., 4:]], axis=-1)
    return x_i, yy.reshape(bs, -1, no)


if __name__ == "__main__":
    key = jax.random.PRNGKey(0)

    # Module config (small synthetic Detect head)
    nc = 3
    no = nc + 5                                   # 8
    anchors_cfg = ((10., 13., 16., 30., 33., 23.),
                   (30., 61., 62., 45., 59., 119.))
    nl = len(anchors_cfg)
    na = len(anchors_cfg[0]) // 2                 # 3
    ch = (4, 8)
    strides = (8.0, 16.0)
    anchors = [np.asarray(a, np.float32).reshape(na, 2) for a in anchors_cfg]

    # Deterministic parameter init (Conv2d 1x1 weights/biases)
    keys = jax.random.split(key, 2 * nl + nl)
    weights, biases = [], []
    for i in range(nl):
        weights.append(0.1 * jax.random.normal(keys[2 * i], (na * no, ch[i], 1, 1),
                                               dtype=jnp.float32))
        biases.append(0.1 * jax.random.normal(keys[2 * i + 1], (na * no,),
                                              dtype=jnp.float32))

    # Inputs: NCHW feature maps, one per level
    bs = 2
    spatial = (16, 8)
    xs = [jax.random.normal(keys[2 * nl + i], (bs, ch[i], spatial[i], spatial[i]),
                            dtype=jnp.float32) for i in range(nl)]

    z_cat, x_list = detect_forward(xs, weights, biases, anchors, strides, no)
    z_cat = jax.block_until_ready(z_cat)
    x_list = [jax.block_until_ready(x) for x in x_list]

    # Verify against a plain-JAX f32 reference of the PyTorch forward.
    # Tolerances relaxed vs the f32 path: kernel uses a bf16 MXU matmul and
    # bf16 outputs (perf feedback), so ~0.4% relative error is expected.
    z_ref, x_ref = [], []
    for i in range(nl):
        xr, zr = _ref_detect_level(xs[i], weights[i], biases[i], anchors[i], strides[i], no)
        x_ref.append(xr)
        z_ref.append(zr)
    z_ref = jnp.concatenate(z_ref, axis=1)

    np.testing.assert_allclose(np.asarray(z_cat.astype(jnp.float32)),
                               np.asarray(z_ref), rtol=2e-2, atol=5e-2)
    for a, b in zip(x_list, x_ref):
        np.testing.assert_allclose(np.asarray(a.astype(jnp.float32)),
                                   np.asarray(b), rtol=2e-2, atol=5e-2)

    print("KERNEL_OK")
</pallas_src>

<mosaic_0001>
module attributes {stable_mosaic.version = 11 : i64} {
  func.func @_detect_kernel(%arg0: i32, %arg1: i32, %arg2: memref<1x4x256xf32, #tpu.memory_space<vmem>>, %arg3: memref<24x4xbf16, #tpu.memory_space<vmem>>, %arg4: memref<24x6xf32, #tpu.memory_space<vmem>>, %arg5: memref<2x256xf32, #tpu.memory_space<vmem>>, %arg6: memref<1x24x256xbf16, #tpu.memory_space<vmem>>, %arg7: memref<1x24x256xbf16, #tpu.memory_space<vmem>>) attributes {dimension_semantics = [#tpu.dimension_semantics<parallel>, #tpu.dimension_semantics<parallel>], iteration_bounds = array<i64: 2, 1>, scalar_prefetch = 0 : i64, scratch_operands = 0 : i64, tpu.core_type = #tpu.core_type<tc>, window_params = [{transform_indices = @transform_0, window_bounds = array<i64: 1, 4, 256>}, {pipeline_mode = #tpu.pipeline_mode<synchronous>, transform_indices = @transform_1, window_bounds = array<i64: 24, 4>}, {pipeline_mode = #tpu.pipeline_mode<synchronous>, transform_indices = @transform_2, window_bounds = array<i64: 24, 6>}, {transform_indices = @transform_3, window_bounds = array<i64: 2, 256>}, {transform_indices = @transform_4, window_bounds = array<i64: 1, 24, 256>}, {transform_indices = @transform_5, window_bounds = array<i64: 1, 24, 256>}]} {
    %c0 = arith.constant 0 : index
    %c0_0 = arith.constant 0 : index
    %c0_1 = arith.constant 0 : index
    %0 = vector.load %arg2[%c0, %c0_0, %c0_1] : memref<1x4x256xf32, #tpu.memory_space<vmem>>, vector<1x4x256xf32>
    %1 = vector.shape_cast %0 : vector<1x4x256xf32> to vector<4x256xf32>
    %2 = arith.truncf %1 : vector<4x256xf32> to vector<4x256xbf16>
    %c0_2 = arith.constant 0 : index
    %c0_3 = arith.constant 0 : index
    %3 = vector.load %arg3[%c0_2, %c0_3] : memref<24x4xbf16, #tpu.memory_space<vmem>>, vector<24x4xbf16>
    %c0_4 = arith.constant 0 : index
    %c0_5 = arith.constant 0 : index
    %4 = vector.load %arg4[%c0_4, %c0_5] : memref<24x6xf32, #tpu.memory_space<vmem>>, vector<24x6xf32>
    %5 = vector.extract_strided_slice %4 {offsets = [0, 0], sizes = [24, 1], strides = [1, 1]} : vector<24x6xf32> to vector<24x1xf32>
    %6 = vector.extract_strided_slice %4 {offsets = [0, 1], sizes = [24, 1], strides = [1, 1]} : vector<24x6xf32> to vector<24x1xf32>
    %7 = vector.extract_strided_slice %4 {offsets = [0, 2], sizes = [24, 1], strides = [1, 1]} : vector<24x6xf32> to vector<24x1xf32>
    %8 = vector.extract_strided_slice %4 {offsets = [0, 3], sizes = [24, 1], strides = [1, 1]} : vector<24x6xf32> to vector<24x1xf32>
    %9 = vector.extract_strided_slice %4 {offsets = [0, 4], sizes = [24, 1], strides = [1, 1]} : vector<24x6xf32> to vector<24x1xf32>
    %10 = vector.extract_strided_slice %4 {offsets = [0, 5], sizes = [24, 1], strides = [1, 1]} : vector<24x6xf32> to vector<24x1xf32>
    %c0_6 = arith.constant 0 : index
    %c0_7 = arith.constant 0 : index
    %11 = vector.load %arg5[%c0_6, %c0_7] : memref<2x256xf32, #tpu.memory_space<vmem>>, vector<1x256xf32>
    %c1 = arith.constant 1 : index
    %c0_8 = arith.constant 0 : index
    %12 = vector.load %arg5[%c1, %c0_8] : memref<2x256xf32, #tpu.memory_space<vmem>>, vector<1x256xf32>
    %cst = arith.constant dense<0.000000e+00> : vector<24x256xf32>
    %13 = tpu.matmul %3, %2, %cst {dimension_numbers = #tpu.dot_dimension_numbers<[1], [0], [0], [1], [0, 0, 1, 1], [], []>} : vector<24x4xbf16>, vector<4x256xbf16>, vector<24x256xf32> -> vector<24x256xf32>
    %14 = vector.broadcast %5 : vector<24x1xf32> to vector<24x256xf32>
    %15 = arith.addf %13, %14 : vector<24x256xf32>
    %16 = arith.truncf %15 : vector<24x256xf32> to vector<24x256xbf16>
    %c0_9 = arith.constant 0 : index
    %c0_10 = arith.constant 0 : index
    %c0_11 = arith.constant 0 : index
    %17 = vector.load %arg6[%c0_9, %c0_10, %c0_11] : memref<1x24x256xbf16, #tpu.memory_space<vmem>>, vector<1x24x256xbf16>
    %18 = vector.shape_cast %17 : vector<1x24x256xbf16> to vector<24x256xbf16>
    %19 = vector.shape_cast %16 : vector<24x256xbf16> to vector<1x24x256xbf16>
    tpu.vector_store %arg6[%c0_9, %c0_10, %c0_11], %19 {strides = array<i32>} : memref<1x24x256xbf16, #tpu.memory_space<vmem>>, vector<1x24x256xbf16>,
    %20 = arith.negf %15 : vector<24x256xf32>
    %21 = math.exp %20 : vector<24x256xf32>
    %cst_12 = arith.constant 1.000000e+00 : f32
    %22 = vector.broadcast %cst_12 : f32 to vector<24x256xf32>
    %23 = arith.addf %22, %21 : vector<24x256xf32>
    %24 = arith.divf %22, %23 : vector<24x256xf32>
    %25 = vector.broadcast %9 : vector<24x1xf32> to vector<24x256xf32>
    %26 = vector.broadcast %11 : vector<1x256xf32> to vector<24x256xf32>
    %27 = arith.mulf %25, %26 : vector<24x256xf32>
    %28 = vector.broadcast %10 : vector<24x1xf32> to vector<24x256xf32>
    %29 = vector.broadcast %12 : vector<1x256xf32> to vector<24x256xf32>
    %30 = arith.mulf %28, %29 : vector<24x256xf32>
    %31 = arith.addf %27, %30 : vector<24x256xf32>
    %32 = vector.broadcast %6 : vector<24x1xf32> to vector<24x256xf32>
    %33 = arith.mulf %32, %24 : vector<24x256xf32>
    %34 = vector.broadcast %7 : vector<24x1xf32> to vector<24x256xf32>
    %35 = arith.addf %33, %34 : vector<24x256xf32>
    %36 = arith.mulf %35, %24 : vector<24x256xf32>
    %37 = vector.broadcast %8 : vector<24x1xf32> to vector<24x256xf32>
    %38 = arith.addf %36, %37 : vector<24x256xf32>
    %39 = arith.addf %38, %31 : vector<24x256xf32>
    %40 = arith.truncf %39 : vector<24x256xf32> to vector<24x256xbf16>
    %c0_13 = arith.constant 0 : index
    %c0_14 = arith.constant 0 : index
    %c0_15 = arith.constant 0 : index
    %41 = vector.load %arg7[%c0_13, %c0_14, %c0_15] : memref<1x24x256xbf16, #tpu.memory_space<vmem>>, vector<1x24x256xbf16>
    %42 = vector.shape_cast %41 : vector<1x24x256xbf16> to vector<24x256xbf16>
    %43 = vector.shape_cast %40 : vector<24x256xbf16> to vector<1x24x256xbf16>
    tpu.vector_store %arg7[%c0_13, %c0_14, %c0_15], %43 {strides = array<i32>} : memref<1x24x256xbf16, #tpu.memory_space<vmem>>, vector<1x24x256xbf16>,
    return
  }
  func.func @transform_0(%arg0: i32, %arg1: i32) -> (i32, i32, i32) {
    %c0_i32 = arith.constant 0 : i32
    %c0_i32_0 = arith.constant 0 : i32
    return %arg0, %c0_i32, %arg1 : i32, i32, i32
  }
  func.func @transform_1(%arg0: i32, %arg1: i32) -> (i32, i32) {
    %c0_i32 = arith.constant 0 : i32
    %c0_i32_0 = arith.constant 0 : i32
    %c0_i32_1 = arith.constant 0 : i32
    return %c0_i32, %c0_i32_0 : i32, i32
  }
  func.func @transform_2(%arg0: i32, %arg1: i32) -> (i32, i32) {
    %c0_i32 = arith.constant 0 : i32
    %c0_i32_0 = arith.constant 0 : i32
    %c0_i32_1 = arith.constant 0 : i32
    return %c0_i32, %c0_i32_0 : i32, i32
  }
  func.func @transform_3(%arg0: i32, %arg1: i32) -> (i32, i32) {
    %c0_i32 = arith.constant 0 : i32
    %c0_i32_0 = arith.constant 0 : i32
    return %c0_i32, %arg1 : i32, i32
  }
  func.func @transform_4(%arg0: i32, %arg1: i32) -> (i32, i32, i32) {
    %c0_i32 = arith.constant 0 : i32
    %c0_i32_0 = arith.constant 0 : i32
    return %arg0, %c0_i32, %arg1 : i32, i32, i32
  }
  func.func @transform_5(%arg0: i32, %arg1: i32) -> (i32, i32, i32) {
    %c0_i32 = arith.constant 0 : i32
    %c0_i32_0 = arith.constant 0 : i32
    return %arg0, %c0_i32, %arg1 : i32, i32, i32
  }
}

</mosaic_0001>

<llo_original>
// kernel: tpu_custom_call.1
$region0: #{tpu_custom_call.1}
  #allocation0 [shape = 'u32[]', space=smem, size = 0x4, offset = 0x4, fixed_abs, tag = 'smem constant byte address 0x4 - core index']
  #allocation1 [shape = 'u32[72,128]{1,0:T(1,128)}', space=vmem, size = 0x9000, scoped, tag = 'internal scratch']
  %s0 = inlined_call_operand.vmem [shape: f32[2,4,256], index: 0, kind: input, shape index: {}]
  %s1 = inlined_call_operand.vmem [shape: bf16[24,4], index: 1, kind: input, shape index: {}]
  %s2 = inlined_call_operand.vmem [shape: f32[24,6], index: 2, kind: input, shape index: {}]
  %s3 = inlined_call_operand.vmem [shape: f32[2,256], index: 3, kind: input, shape index: {}]
  %s4 = inlined_call_operand.hbm [shape: bf16[2,24,256], index: 4, kind: output, shape index: {0}]
  %s5 = inlined_call_operand.hbm [shape: bf16[2,24,256], index: 5, kind: output, shape index: {1}]
  %6 = xla_tuple %s4, %s5
  %s7 = sld [smem:[#allocation0]]
  $region57: #{tpu_custom_call.1} parent=0
    _
  %s9 = ssub.s32 1, %s7
  %s10 = scalar_select 0, %s9, %s7
  $region1: #{tpu_custom_call.1} parent=0
    #allocation2 [shape = 'u8[24576]{0}', space=vmem, size = 0x6000, scoped, tag = 'output window, operand 0']
    #allocation3 [shape = 's32[2]{0}', space=sflag, size = 0x8, scoped, tag = 'scoped memory for tpu_custom_call.1']
    #allocation4 [shape = 'u8[24576]{0}', space=vmem, size = 0x6000, scoped, tag = 'output window, operand 1']
    #allocation5 [shape = 's32[2]{0}', space=sflag, size = 0x8, scoped, tag = 'scoped memory for tpu_custom_call.1']
    %11 = vsyncpa [#allocation3], 0
    %s12 = scalar_lea.sflag [#allocation3], 1
    %13 = vsyncpa %s12, 0
    %14 = vsyncpa [#allocation5], 0
    %s15 = scalar_lea.sflag [#allocation5], 1
    %16 = vsyncpa %s15, 0
    loop: start=0, step=1, limit=4
    $region2: #{tpu_custom_call.1} parent=1 // loop_pre_header
      _
    $region3: #{tpu_custom_call.1} parent=1 // loop_header
      %s18 = sphi 0, %s22
      %p19 = scmp.ge.s32.totalorder %s18, 4
      %s25 = sphi 0, %s37
      %s26 = sphi 0, %s33
      %s27 = sphi 0, %s25
      %s28 = sphi 0, %s26
      %s29 = sphi 0, %s27
      %s30 = sphi 0, %s28
      %s42 = sphi 0, %s44
      %s45 = sphi 0, %s42
      %s46 = sphi 0, %s45
      %s62 = sphi 0, %s46
      %s66 = sphi 0, %s66
      %s68 = sphi 0, %s66
      %s69 = sphi 0, %s68
      %s83 = sphi 0, %s69
      %s87 = sphi 0, %s87
      %s89 = sphi 0, %s87
      %s90 = sphi 0, %s89
      %s104 = sphi 0, %s90
      %s110 = sphi 0, %s112
      %s113 = sphi 0, %s110
      %s114 = sphi 0, %s113
      %s130 = sphi 0, %s114
      %s138 = sphi 0, %s140
      %s141 = sphi 0, %s138
      %s142 = sphi 0, %s141
      %s158 = sphi 0, %s142
      %s166 = sphi 0, %s168
      %s169 = sphi 0, %s166
      %s170 = sphi 0, %s169
      %s186 = sphi 0, %s170
    $region4: #{tpu_custom_call.1} parent=1 // loop_header_branch
      %21 = sbr.rel (%p19) target = $region8
    $region5: #{tpu_custom_call.1} parent=1 // loop_body
      %s23 = ssub.s32 %s18, 1
      %s24 = ssub.s32 %s18, 2
      %s31 = sadd.s32 1, %s26
      %p32 = scmp.ge.s32.totalorder %s31, 1
      %s33 = scalar_select %p32, 0, %s31
      %s34 = sadd.s32 1, %s25
      %s35 = scalar_select %p32, %s34, %s25
      %p36 = scmp.ge.s32.totalorder %s35, 2
      %s37 = scalar_select %p36, 0, %s35
      %s38 = ssub.s32 %s25, %s37
      %s39 = ssub.s32 %s26, %s33
      %s40 = sor.u32 %s38, %s39
      %p41 = scmp.eq.s32.totalorder %s40, 0
      %s43 = sadd.s32 %s42, 1
      %s44 = scalar_select %p41, %s42, %s43
      %p47 = pneg %p41
      %p48 = scmp.eq.s32.totalorder %s18, 1
      %p49 = por %p47, %p48
      %p50 = scmp.ne.s32.totalorder %s42, %s45
      %p51 = scmp.eq.s32.totalorder %s18, 0
      %p52 = por %p50, %p51
      %p53 = scmp.ne.s32.totalorder %s42, %s45
      %p54 = scmp.eq.s32.totalorder %s23, 1
      %p55 = por %p53, %p54
      %p56 = scmp.ne.s32.totalorder %s45, %s46
      %p57 = scmp.eq.s32.totalorder %s23, 0
      %p58 = por %p56, %p57
      %p59 = scmp.ne.s32.totalorder %s45, %s46
      %p60 = scmp.eq.s32.totalorder %s24, 1
      %p61 = por %p59, %p60
      %p63 = scmp.ne.s32.totalorder %s46, %s62
      %p64 = scmp.eq.s32.totalorder %s24, 0
      %p65 = por %p63, %p64
      %s67 = sadd.s32 %s66, 1
      %p70 = scmp.eq.s32.totalorder %s18, 1
      %p71 = scmp.ne.s32.totalorder %s66, %s68
      %p72 = scmp.eq.s32.totalorder %s18, 0
      %p73 = por %p71, %p72
      %p74 = scmp.ne.s32.totalorder %s66, %s68
      %p75 = scmp.eq.s32.totalorder %s23, 1
      %p76 = por %p74, %p75
      %p77 = scmp.ne.s32.totalorder %s68, %s69
      %p78 = scmp.eq.s32.totalorder %s23, 0
      %p79 = por %p77, %p78
      %p80 = scmp.ne.s32.totalorder %s68, %s69
      %p81 = scmp.eq.s32.totalorder %s24, 1
      %p82 = por %p80, %p81
      %p84 = scmp.ne.s32.totalorder %s69, %s83
      %p85 = scmp.eq.s32.totalorder %s24, 0
      %p86 = por %p84, %p85
      %s88 = sadd.s32 %s87, 1
      %p91 = scmp.eq.s32.totalorder %s18, 1
      %p92 = scmp.ne.s32.totalorder %s87, %s89
      %p93 = scmp.eq.s32.totalorder %s18, 0
      %p94 = por %p92, %p93
      %p95 = scmp.ne.s32.totalorder %s87, %s89
      %p96 = scmp.eq.s32.totalorder %s23, 1
      %p97 = por %p95, %p96
      %p98 = scmp.ne.s32.totalorder %s89, %s90
      %p99 = scmp.eq.s32.totalorder %s23, 0
      %p100 = por %p98, %p99
      %p101 = scmp.ne.s32.totalorder %s89, %s90
      %p102 = scmp.eq.s32.totalorder %s24, 1
      %p103 = por %p101, %p102
      %p105 = scmp.ne.s32.totalorder %s90, %s104
      %p106 = scmp.eq.s32.totalorder %s24, 0
      %p107 = por %p105, %p106
      %s108 = ssub.s32 %s26, %s33
      %p109 = scmp.eq.s32.totalorder %s108, 0
      %s111 = sadd.s32 %s110, 1
      %s112 = scalar_select %p109, %s110, %s111
      %p115 = pneg %p109
      %p116 = scmp.eq.s32.totalorder %s18, 1
      %p117 = por %p115, %p116
      %p118 = scmp.ne.s32.totalorder %s110, %s113
      %p119 = scmp.eq.s32.totalorder %s18, 0
      %p120 = por %p118, %p119
      %p121 = scmp.ne.s32.totalorder %s110, %s113
      %p122 = scmp.eq.s32.totalorder %s23, 1
      %p123 = por %p121, %p122
      %p124 = scmp.ne.s32.totalorder %s113, %s114
      %p125 = scmp.eq.s32.totalorder %s23, 0
      %p126 = por %p124, %p125
      %p127 = scmp.ne.s32.totalorder %s113, %s114
      %p128 = scmp.eq.s32.totalorder %s24, 1
      %p129 = por %p127, %p128
      %p131 = scmp.ne.s32.totalorder %s114, %s130
      %p132 = scmp.eq.s32.totalorder %s24, 0
      %p133 = por %p131, %p132
      %s134 = ssub.s32 %s25, %s37
      %s135 = ssub.s32 %s26, %s33
      %s136 = sor.u32 %s134, %s135
      %p137 = scmp.eq.s32.totalorder %s136, 0
      %s139 = sadd.s32 %s138, 1
      %s140 = scalar_select %p137, %s138, %s139
      %p143 = pneg %p137
      %p144 = scmp.eq.s32.totalorder %s18, 1
      %p145 = por %p143, %p144
      %p146 = scmp.ne.s32.totalorder %s138, %s141
      %p147 = scmp.eq.s32.totalorder %s18, 0
      %p148 = por %p146, %p147
      %p149 = scmp.ne.s32.totalorder %s138, %s141
      %p150 = scmp.eq.s32.totalorder %s23, 1
      %p151 = por %p149, %p150
      %p152 = scmp.ne.s32.totalorder %s141, %s142
      %p153 = scmp.eq.s32.totalorder %s23, 0
      %p154 = por %p152, %p153
      %p155 = scmp.ne.s32.totalorder %s141, %s142
      %p156 = scmp.eq.s32.totalorder %s24, 1
      %p157 = por %p155, %p156
      %p159 = scmp.ne.s32.totalorder %s142, %s158
      %p160 = scmp.eq.s32.totalorder %s24, 0
      %p161 = por %p159, %p160
      %s162 = ssub.s32 %s25, %s37
      %s163 = ssub.s32 %s26, %s33
      %s164 = sor.u32 %s162, %s163
      %p165 = scmp.eq.s32.totalorder %s164, 0
      %s167 = sadd.s32 %s166, 1
      %s168 = scalar_select %p165, %s166, %s167
      %p171 = pneg %p165
      %p172 = scmp.eq.s32.totalorder %s18, 1
      %p173 = por %p171, %p172
      %p174 = scmp.ne.s32.totalorder %s166, %s169
      %p175 = scmp.eq.s32.totalorder %s18, 0
      %p176 = por %p174, %p175
      %p177 = scmp.ne.s32.totalorder %s166, %s169
      %p178 = scmp.eq.s32.totalorder %s23, 1
      %p179 = por %p177, %p178
      %p180 = scmp.ne.s32.totalorder %s169, %s170
      %p181 = scmp.eq.s32.totalorder %s23, 0
      %p182 = por %p180, %p181
      %p183 = scmp.ne.s32.totalorder %s169, %s170
      %p184 = scmp.eq.s32.totalorder %s24, 1
      %p185 = por %p183, %p184
      %p187 = scmp.ne.s32.totalorder %s170, %s186
      %p188 = scmp.eq.s32.totalorder %s24, 0
      %p189 = por %p187, %p188
      %p190 = scmp.le.s32.totalorder 1, %s18
      %p191 = scmp.lt.s32.totalorder %s18, 3
      %p192 = pnand %p190, %p191
      %p193 = pneg %p192
      // Predicated region
      $region9: #{tpu_custom_call.1} parent=5 // pred_check
        _
      $region10: #{tpu_custom_call.1} parent=5 // pred_check_branch
        %195 = sbr.rel (%p192) target = $region12
      $region11: #{tpu_custom_call.1} parent=5 // pred_region
        %s196 = ssub.s32 %s18, 1
        // Predicated region
        $region13: #{tpu_custom_call.1} parent=11 // pred_check
          %p197 = pneg %p79
        $region14: #{tpu_custom_call.1} parent=11 // pred_check_branch
          %199 = sbr.rel (%p197) target = $region16
        $region15: #{tpu_custom_call.1} parent=11 // pred_region
          _
        $region16: #{tpu_custom_call.1} parent=11 // pred_fallthru
          _
        // Predicated region
        $region17: #{tpu_custom_call.1} parent=11 // pred_check
          %p200 = pneg %p100
        $region18: #{tpu_custom_call.1} parent=11 // pred_check_branch
          %202 = sbr.rel (%p200) target = $region20
        $region19: #{tpu_custom_call.1} parent=11 // pred_region
          _
        $region20: #{tpu_custom_call.1} parent=11 // pred_fallthru
          _
        // Predicated region
        $region21: #{tpu_custom_call.1} parent=11 // pred_check
          %p203 = pneg %p126
        $region22: #{tpu_custom_call.1} parent=11 // pred_check_branch
          %205 = sbr.rel (%p203) target = $region24
        $region23: #{tpu_custom_call.1} parent=11 // pred_region
          %s206 = smul.u32 2, %s28
          %p207 = scmp.lt.s32.totalorder %s206, 1
          %s208 = scalar_select %p207, %s206, 1
          %s209 = smul.addr %s208, 2
          %s210 = scalar_lea.vmem %s3, %s209
          %s211 = smul.u32 2, %s28
        $region24: #{tpu_custom_call.1} parent=11 // pred_fallthru
          _
      $region12: #{tpu_custom_call.1} parent=5 // pred_fallthru
        _
      %p212 = scmp.lt.s32.totalorder %s18, 2
      // Predicated region
      $region25: #{tpu_custom_call.1} parent=5 // pred_check
        %p213 = pneg %p212
      $region26: #{tpu_custom_call.1} parent=5 // pred_check_branch
        %215 = sbr.rel (%p213) target = $region28
      $region27: #{tpu_custom_call.1} parent=5 // pred_region
        // Predicated region
        $region29: #{tpu_custom_call.1} parent=27 // pred_check
          %p216 = pneg %p52
        $region30: #{tpu_custom_call.1} parent=27 // pred_check_branch
          %218 = sbr.rel (%p216) target = $region32
        $region31: #{tpu_custom_call.1} parent=27 // pred_region
          %s219 = smul.u32 2, %s26
          %p220 = scmp.lt.s32.totalorder %s25, 1
          %s221 = scalar_select %p220, %s25, 1
          %p222 = scmp.lt.s32.totalorder %s219, 1
          %s223 = scalar_select %p222, %s219, 1
          %s224 = smul.addr %s221, 2
          %s225 = sadd.s32 %s223, %s224
          %s226 = smul.addr %s225, 4
          %s227 = scalar_lea.vmem %s0, %s226
          %s228 = smul.u32 2, %s26
        $region32: #{tpu_custom_call.1} parent=27 // pred_fallthru
          _
      $region28: #{tpu_custom_call.1} parent=5 // pred_fallthru
        _
      %p229 = scmp.le.s32.totalorder 1, %s18
      %p230 = scmp.lt.s32.totalorder %s18, 3
      %p231 = pnand %p229, %p230
      %p232 = pneg %p231
      // Predicated region
      $region33: #{tpu_custom_call.1} parent=5 // pred_check
        _
      $region34: #{tpu_custom_call.1} parent=5 // pred_check_branch
        %234 = sbr.rel (%p231) target = $region36
      $region35: #{tpu_custom_call.1} parent=5 // pred_region
        %s235 = ssub.s32 %s18, 1
        %s236 = smul.u32 2, %s28
        %p237 = scmp.lt.s32.totalorder %s27, 1
        %s238 = scalar_select %p237, %s27, 1
        %p239 = scmp.lt.s32.totalorder %s236, 1
        %s240 = scalar_select %p239, %s236, 1
        %s241 = smul.addr %s238, 2
        %s242 = sadd.s32 %s240, %s241
        %s243 = smul.addr %s242, 4
        %s244 = scalar_lea.vmem %s0, %s243
        %p245 = pneg %p58
        %p246 = pneg %p55
        %p247 = pneg %p79
        %p248 = pneg %p76
        %p249 = pneg %p100
        %p250 = pneg %p97
        %s251 = smul.u32 2, %s28
        %p252 = scmp.lt.s32.totalorder %s251, 1
        %s253 = scalar_select %p252, %s251, 1
        %s254 = smul.addr %s253, 2
        %s255 = scalar_lea.vmem %s3, %s254
        %p256 = pneg %p126
        %p257 = pneg %p123
        %p258 = pneg %p154
        %p259 = pneg %p151
        %s260 = sand.u32 %s141, 1
        %s261 = scalar_lea.sflag [#allocation3], %s260
        %s262 = sand.u32 %s141, 1
        %s263 = smul.addr %s262, 24
        %s264 = scalar_lea.vmem [#allocation2], %s263
        %p265 = pneg %p182
        %p266 = pneg %p179
        %s267 = sand.u32 %s169, 1
        %s268 = scalar_lea.sflag [#allocation5], %s267
        %s269 = sand.u32 %s169, 1
        %s270 = smul.addr %s269, 24
        %s271 = scalar_lea.vmem [#allocation4], %s270
        %s272 = smul.u32 2, %s28
        %p273 = scmp.lt.s32.totalorder %s27, 1
        %s274 = scalar_select %p273, %s27, 1
        %p275 = scmp.lt.s32.totalorder %s272, 1
        %s276 = scalar_select %p275, %s272, 1
        %s277 = smul.addr %s274, 2
        %s278 = sadd.s32 %s276, %s277
        %s279 = smul.addr %s278, 4
        %s280 = scalar_lea.vmem %s0, %s279
        %s281 = smul.u32 2, %s28
        %s282 = smul.u32 2, %s28
        %p283 = scmp.lt.s32.totalorder %s282, 1
        %s284 = scalar_select %p283, %s282, 1
        %s285 = smul.addr %s284, 2
        %s286 = scalar_lea.vmem %s3, %s285
        %s287 = smul.u32 2, %s28
        %s288 = smul.u32 2, %s28
        %s289 = smul.u32 2, %s28
        %v291 = vld [vmem:[%s280] sm:$0xff]
        %293 = vst [vmem:[#allocation1] ss:$2 sm:$0xff] %v291
        %v294 = vld.sshfl [vmem:[#allocation1] sm:$0xff pattern:$0x75316420]
        %v295 = vld.sshfl [vmem:[#allocation1 + $0x8] sm:$0xff pattern:$0x75316420]
        %v298 = vpack.c.bf16 %v294, %v294
        %v299 = vpack.c.bf16 %v295, %v295
        %v300 = vld [vmem:[%s1] sm:$0xf]
        %v301 = vld [vmem:[%s1 + $0x4] sm:$0xf]
        %v302 = vld [vmem:[%s1 + $0x8] sm:$0xf]
        %v303 = vld [vmem:[%s2] sm:$0xff]
        %v304 = vld [vmem:[%s2 + $0x8] sm:$0xff]
        %v305 = vld [vmem:[%s2 + $0x10] sm:$0xff]
        %v306 = vld [vmem:[%s286] ss:$2 sm:$0x3]
        %s307 = scalar_lea.vmem %s286, 1
        %v308 = vld [vmem:[%s307] ss:$2 sm:$0x3]
        %310 = vset.pattern.permute.xlu0 0
        %311 = vperm.xlu0 %310, %v303
        %v312 = vpop.permute.xlu0 %311
        %315 = vset.pattern.permute.xlu0 0
        %316 = vperm.xlu0 %315, %v304
        %v317 = vpop.permute.xlu0 %316
        %320 = vset.pattern.permute.xlu0 0
        %321 = vperm.xlu0 %320, %v305
        %v322 = vpop.permute.xlu0 %321
        %v327 = vunpack.c.l.b16 %v300
        %v328 = vunpack.c.l.b16 %v301
        %v329 = vunpack.c.l.b16 %v302
        %v330 = vpack.c.b16 %v328, %v327
        %v331 = vpack.c.b16 %v329, %v329
        %vm332 = vcmask 31744
        %v334 = vsel %vm332, %v330, 0
        %v337 = vsel %vm332, %v331, 0
        %vm339 = vcmask 1041408
        %v341 = vsel %vm339, %v298, 0
        %v344 = vsel %vm339, %v299, 0
        %346 = vmatpush.bf16.msra.mxu0 0
        %347 = vmatpush.bf16.msra.mxu0 0
        %348 = vmatpush.bf16.msra.mxu0 0
        %349 = vmatpush.bf16.msra.mxu0 0
        %350 = vmatpush.bf16.msra.mxu0 0
        %351 = vmatpush.bf16.msra.mxu0 0
        %352 = vmatpush.bf16.msra.mxu0 0
        %353 = vmatpush.bf16.msra.mxu0 %v341
        %354 = vmatmul.bf16.gmra.mxu0 %v334
        %v355 = vpop.f32.mrf.mxu0
        %v356 = vadd.f32 %v312, %v355
        %v357 = vpop.f32.mrf.mxu0
        %v358 = vadd.f32 %v317, %v357
        %359 = vmatmul.bf16.gmra.mxu0 %v337
        %v360 = vpop.f32.mrf.mxu0
        %v361 = vadd.f32 %v322, %v360
        %v362 = vpop.f32.mrf.mxu0
        %363 = vdwg.mxu0
        %364 = vmatpush.bf16.msra.mxu0 0
        %365 = vmatpush.bf16.msra.mxu0 0
        %366 = vmatpush.bf16.msra.mxu0 0
        %367 = vmatpush.bf16.msra.mxu0 0
        %368 = vmatpush.bf16.msra.mxu0 0
        %369 = vmatpush.bf16.msra.mxu0 0
        %370 = vmatpush.bf16.msra.mxu0 0
        %371 = vmatpush.bf16.msra.mxu0 %v344
        %372 = vmatmul.bf16.gmra.mxu0 %v334
        %v373 = vpop.f32.mrf.mxu0
        %v374 = vadd.f32 %v312, %v373
        %v375 = vpop.f32.mrf.mxu0
        %v376 = vadd.f32 %v317, %v375
        %377 = vmatmul.bf16.gmra.mxu0 %v337
        %v378 = vpop.f32.mrf.mxu0
        %v379 = vadd.f32 %v322, %v378
        %v380 = vpop.f32.mrf.mxu0
        %381 = vdwg.mxu0
        %v382 = vpack.c.bf16 %v374, %v356
        %v383 = vpack.c.bf16 %v376, %v358
        %v384 = vpack.c.bf16 %v379, %v361
        %385 = vst [vmem:[%s264] sm:$0xff] %v382
        %386 = vst [vmem:[%s264 + $0x8] sm:$0xff] %v383
        %387 = vst [vmem:[%s264 + $0x10] sm:$0xff] %v384
        %v388 = vxor.u32 %v356, 2147483648
        %v389 = vxor.u32 %v374, 2147483648
        %v390 = vxor.u32 %v358, 2147483648
        %v391 = vxor.u32 %v376, 2147483648
        %v392 = vxor.u32 %v361, 2147483648
        %v393 = vxor.u32 %v379, 2147483648
        %v394 = vmul.f32 %v388, 1.442695
        %v395 = vpow.pop %v394
        %v396 = vmul.f32 %v389, 1.442695
        %v397 = vpow.pop %v396
        %v398 = vmul.f32 %v390, 1.442695
        %v399 = vpow.pop %v398
        %v400 = vmul.f32 %v391, 1.442695
        %v401 = vpow.pop %v400
        %v402 = vmul.f32 %v392, 1.442695
        %v403 = vpow.pop %v402
        %v404 = vmul.f32 %v393, 1.442695
        %v405 = vpow.pop %v404
        %v406 = vadd.f32 %v395, 1.0
        %v407 = vadd.f32 %v397, 1.0
        %v408 = vadd.f32 %v399, 1.0
        %v409 = vadd.f32 %v401, 1.0
        %v410 = vadd.f32 %v403, 1.0
        %v411 = vadd.f32 %v405, 1.0
        %v412 = vrcp.pop %v406
        %v413 = vmul.f32 %v406, %v412
        %v414 = vsub.f32 1.0, %v413
        %v415 = vmul.f32 %v412, %v414
        %v416 = vadd.f32 %v412, %v415
        %vm417 = vweird.f32 %v406
        %vm418 = vweird.f32 %v412
        %vm419 = vmor %vm417, %vm418
        %v420 = vsel %vm419, %v412, %v416
        %v421 = vand.u32 2147483647, %v406
        %vm422 = vcmp.eq.f32.partialorder %v421, 8.507059e+37
        %v423 = vand.u32 %v406, 2147483648
        %v424 = vor.u32 1.1754944e-38, %v423
        %v425 = vsel %vm422, %v424, %v420
        %v426 = vmul.f32 1.0, %v425
        %v427 = vrcp.pop %v407
        %v428 = vmul.f32 %v407, %v427
        %v429 = vsub.f32 1.0, %v428
        %v430 = vmul.f32 %v427, %v429
        %v431 = vadd.f32 %v427, %v430
        %vm432 = vweird.f32 %v407
        %vm433 = vweird.f32 %v427
        %vm434 = vmor %vm432, %vm433
        %v435 = vsel %vm434, %v427, %v431
        %v436 = vand.u32 2147483647, %v407
        %vm437 = vcmp.eq.f32.partialorder %v436, 8.507059e+37
        %v438 = vand.u32 %v407, 2147483648
        %v439 = vor.u32 1.1754944e-38, %v438
        %v440 = vsel %vm437, %v439, %v435
        %v441 = vmul.f32 1.0, %v440
        %v442 = vrcp.pop %v408
        %v443 = vmul.f32 %v408, %v442
        %v444 = vsub.f32 1.0, %v443
        %v445 = vmul.f32 %v442, %v444
        %v446 = vadd.f32 %v442, %v445
        %vm447 = vweird.f32 %v408
        %vm448 = vweird.f32 %v442
        %vm449 = vmor %vm447, %vm448
        %v450 = vsel %vm449, %v442, %v446
        %v451 = vand.u32 2147483647, %v408
        %vm452 = vcmp.eq.f32.partialorder %v451, 8.507059e+37
        %v453 = vand.u32 %v408, 2147483648
        %v454 = vor.u32 1.1754944e-38, %v453
        %v455 = vsel %vm452, %v454, %v450
        %v456 = vmul.f32 1.0, %v455
        %v457 = vrcp.pop %v409
        %v458 = vmul.f32 %v409, %v457
        %v459 = vsub.f32 1.0, %v458
        %v460 = vmul.f32 %v457, %v459
        %v461 = vadd.f32 %v457, %v460
        %vm462 = vweird.f32 %v409
        %vm463 = vweird.f32 %v457
        %vm464 = vmor %vm462, %vm463
        %v465 = vsel %vm464, %v457, %v461
        %v466 = vand.u32 2147483647, %v409
        %vm467 = vcmp.eq.f32.partialorder %v466, 8.507059e+37
        %v468 = vand.u32 %v409, 2147483648
        %v469 = vor.u32 1.1754944e-38, %v468
        %v470 = vsel %vm467, %v469, %v465
        %v471 = vmul.f32 1.0, %v470
        %v472 = vrcp.pop %v410
        %v473 = vmul.f32 %v410, %v472
        %v474 = vsub.f32 1.0, %v473
        %v475 = vmul.f32 %v472, %v474
        %v476 = vadd.f32 %v472, %v475
        %vm477 = vweird.f32 %v410
        %vm478 = vweird.f32 %v472
        %vm479 = vmor %vm477, %vm478
        %v480 = vsel %vm479, %v472, %v476
        %v481 = vand.u32 2147483647, %v410
        %vm482 = vcmp.eq.f32.partialorder %v481, 8.507059e+37
        %v483 = vand.u32 %v410, 2147483648
        %v484 = vor.u32 1.1754944e-38, %v483
        %v485 = vsel %vm482, %v484, %v480
        %v486 = vmul.f32 1.0, %v485
        %v487 = vrcp.pop %v411
        %v488 = vmul.f32 %v411, %v487
        %v489 = vsub.f32 1.0, %v488
        %v490 = vmul.f32 %v487, %v489
        %v491 = vadd.f32 %v487, %v490
        %vm492 = vweird.f32 %v411
        %vm493 = vweird.f32 %v487
        %vm494 = vmor %vm492, %vm493
        %v495 = vsel %vm494, %v487, %v491
        %v496 = vand.u32 2147483647, %v411
        %vm497 = vcmp.eq.f32.partialorder %v496, 8.507059e+37
        %v498 = vand.u32 %v411, 2147483648
        %v499 = vor.u32 1.1754944e-38, %v498
        %v500 = vsel %vm497, %v499, %v495
        %v501 = vmul.f32 1.0, %v500
        %502 = vset.pattern.permute.xlu0 4
        %503 = vperm.xlu0 %502, %v303
        %v504 = vpop.permute.xlu0 %503
        %506 = vset.pattern.permute.xlu0 4
        %507 = vperm.xlu0 %506, %v304
        %v508 = vpop.permute.xlu0 %507
        %510 = vset.pattern.permute.xlu0 4
        %511 = vperm.xlu0 %510, %v305
        %v512 = vpop.permute.xlu0 %511
        %v515 = vperm.slane %v306, 0
        %v516 = vperm.slane %v306, 1
        %v519 = vmul.f32 %v504, %v515
        %v520 = vmul.f32 %v504, %v516
        %v521 = vmul.f32 %v508, %v515
        %v522 = vmul.f32 %v508, %v516
        %v523 = vmul.f32 %v512, %v515
        %v524 = vmul.f32 %v512, %v516
        %525 = vset.pattern.permute.xlu0 5
        %526 = vperm.xlu0 %525, %v303
        %v527 = vpop.permute.xlu0 %526
        %529 = vset.pattern.permute.xlu0 5
        %530 = vperm.xlu0 %529, %v304
        %v531 = vpop.permute.xlu0 %530
        %533 = vset.pattern.permute.xlu0 5
        %534 = vperm.xlu0 %533, %v305
        %v535 = vpop.permute.xlu0 %534
        %v538 = vperm.slane %v308, 0
        %v539 = vperm.slane %v308, 1
        %v542 = vmul.f32 %v527, %v538
        %v543 = vmul.f32 %v527, %v539
        %v544 = vmul.f32 %v531, %v538
        %v545 = vmul.f32 %v531, %v539
        %v546 = vmul.f32 %v535, %v538
        %v547 = vmul.f32 %v535, %v539
        %v548 = vadd.f32 %v519, %v542
        %v549 = vadd.f32 %v520, %v543
        %v550 = vadd.f32 %v521, %v544
        %v551 = vadd.f32 %v522, %v545
        %v552 = vadd.f32 %v523, %v546
        %v553 = vadd.f32 %v524, %v547
        %554 = vset.pattern.permute.xlu0 1
        %555 = vperm.xlu0 %554, %v303
        %v556 = vpop.permute.xlu0 %555
        %558 = vset.pattern.permute.xlu0 1
        %559 = vperm.xlu0 %558, %v304
        %v560 = vpop.permute.xlu0 %559
        %562 = vset.pattern.permute.xlu0 1
        %563 = vperm.xlu0 %562, %v305
        %v564 = vpop.permute.xlu0 %563
        %v566 = vmul.f32 %v556, %v426
        %v567 = vmul.f32 %v556, %v441
        %v568 = vmul.f32 %v560, %v456
        %v569 = vmul.f32 %v560, %v471
        %v570 = vmul.f32 %v564, %v486
        %v571 = vmul.f32 %v564, %v501
        %572 = vset.pattern.permute.xlu0 2
        %573 = vperm.xlu0 %572, %v303
        %v574 = vpop.permute.xlu0 %573
        %576 = vset.pattern.permute.xlu0 2
        %577 = vperm.xlu0 %576, %v304
        %v578 = vpop.permute.xlu0 %577
        %580 = vset.pattern.permute.xlu0 2
        %581 = vperm.xlu0 %580, %v305
        %v582 = vpop.permute.xlu0 %581
        %v584 = vadd.f32 %v566, %v574
        %v585 = vadd.f32 %v567, %v574
        %v586 = vadd.f32 %v568, %v578
        %v587 = vadd.f32 %v569, %v578
        %v588 = vadd.f32 %v570, %v582
        %v589 = vadd.f32 %v571, %v582
        %v590 = vmul.f32 %v584, %v426
        %v591 = vmul.f32 %v585, %v441
        %v592 = vmul.f32 %v586, %v456
        %v593 = vmul.f32 %v587, %v471
        %v594 = vmul.f32 %v588, %v486
        %v595 = vmul.f32 %v589, %v501
        %596 = vset.pattern.permute.xlu0 3
        %597 = vperm.xlu0 %596, %v303
        %v598 = vpop.permute.xlu0 %597
        %600 = vset.pattern.permute.xlu0 3
        %601 = vperm.xlu0 %600, %v304
        %v602 = vpop.permute.xlu0 %601
        %604 = vset.pattern.permute.xlu0 3
        %605 = vperm.xlu0 %604, %v305
        %v606 = vpop.permute.xlu0 %605
        %v608 = vadd.f32 %v590, %v598
        %v609 = vadd.f32 %v591, %v598
        %v610 = vadd.f32 %v592, %v602
        %v611 = vadd.f32 %v593, %v602
        %v612 = vadd.f32 %v594, %v606
        %v613 = vadd.f32 %v595, %v606
        %v614 = vadd.f32 %v608, %v548
        %v615 = vadd.f32 %v609, %v549
        %v616 = vadd.f32 %v610, %v550
        %v617 = vadd.f32 %v611, %v551
        %v618 = vadd.f32 %v612, %v552
        %v619 = vadd.f32 %v613, %v553
        %v620 = vpack.c.bf16 %v615, %v614
        %v621 = vpack.c.bf16 %v617, %v616
        %v622 = vpack.c.bf16 %v619, %v618
        %623 = vst [vmem:[%s271] sm:$0xff] %v620
        %624 = vst [vmem:[%s271 + $0x8] sm:$0xff] %v621
        %625 = vst [vmem:[%s271 + $0x10] sm:$0xff] %v622
        %s626 = sand.u32 %s141, 1
        %s627 = scalar_lea.sflag [#allocation3], %s626
        %s628 = sand.u32 %s141, 1
        %s629 = smul.addr %s628, 24
        %s630 = scalar_lea.vmem [#allocation2], %s629
        %s631 = sand.u32 %s169, 1
        %s632 = scalar_lea.sflag [#allocation5], %s631
        %s633 = sand.u32 %s169, 1
        %s634 = smul.addr %s633, 24
        %s635 = scalar_lea.vmem [#allocation4], %s634
        // Predicated region
        $region37: #{tpu_custom_call.1} parent=35 // pred_check
          %p636 = pneg %p151
        $region38: #{tpu_custom_call.1} parent=35 // pred_check_branch
          %638 = sbr.rel (%p636) target = $region40
        $region39: #{tpu_custom_call.1} parent=35 // pred_region
          %s639 = smul.u32 2, %s28
          %641 = vsyncadd %s627, 0
          %s642 = smul.addr %s27, 6
          %s643 = sadd.s32 %s639, %s642
          %s644 = smul.addr %s643, 4
          %s645 = scalar_lea.hbm %s4, %s644
          %s646 = sshll.u32 %s630, 4
          %s647 = int_to_ptr.vmem [resolvable:$true] %s646
          %s648 = sshll.u32 %s645, 4
          %s649 = int_to_ptr.hbm [resolvable:$true] %s648
          %654 = dma.vmem_to_hbm [thread:$0]  %s647, 384, %s649, %s627, 128, 128, 8
        $region40: #{tpu_custom_call.1} parent=35 // pred_fallthru
          _
        // Predicated region
        $region41: #{tpu_custom_call.1} parent=35 // pred_check
          %p655 = pneg %p179
        $region42: #{tpu_custom_call.1} parent=35 // pred_check_branch
          %657 = sbr.rel (%p655) target = $region44
        $region43: #{tpu_custom_call.1} parent=35 // pred_region
          %s658 = smul.u32 2, %s28
          %660 = vsyncadd %s632, 0
          %s661 = smul.addr %s27, 6
          %s662 = sadd.s32 %s658, %s661
          %s663 = smul.addr %s662, 4
          %s664 = scalar_lea.hbm %s5, %s663
          %s665 = sshll.u32 %s635, 4
          %s666 = int_to_ptr.vmem [resolvable:$true] %s665
          %s667 = sshll.u32 %s664, 4
          %s668 = int_to_ptr.hbm [resolvable:$true] %s667
          %673 = dma.vmem_to_hbm [thread:$0]  %s666, 384, %s668, %s632, 128, 128, 8
        $region44: #{tpu_custom_call.1} parent=35 // pred_fallthru
          _
      $region36: #{tpu_custom_call.1} parent=5 // pred_fallthru
        _
      %p674 = scmp.le.s32.totalorder 2, %s18
      // Predicated region
      $region45: #{tpu_custom_call.1} parent=5 // pred_check
        %p675 = pneg %p674
      $region46: #{tpu_custom_call.1} parent=5 // pred_check_branch
        %677 = sbr.rel (%p675) target = $region48
      $region47: #{tpu_custom_call.1} parent=5 // pred_region
        %s678 = ssub.s32 %s18, 2
        // Predicated region
        $region49: #{tpu_custom_call.1} parent=47 // pred_check
          %p679 = pneg %p157
        $region50: #{tpu_custom_call.1} parent=47 // pred_check_branch
          %681 = sbr.rel (%p679) target = $region52
        $region51: #{tpu_custom_call.1} parent=47 // pred_region
          %s682 = sand.u32 %s142, 1
          %s683 = scalar_lea.sflag [#allocation3], %s682
          %s684 = sand.u32 %s142, 1
          %s685 = smul.addr %s684, 24
          %s686 = scalar_lea.vmem [#allocation2], %s685
          %688 = dma.done %s683, 384
        $region52: #{tpu_custom_call.1} parent=47 // pred_fallthru
          _
        // Predicated region
        $region53: #{tpu_custom_call.1} parent=47 // pred_check
          %p689 = pneg %p185
        $region54: #{tpu_custom_call.1} parent=47 // pred_check_branch
          %691 = sbr.rel (%p689) target = $region56
        $region55: #{tpu_custom_call.1} parent=47 // pred_region
          %s692 = sand.u32 %s170, 1
          %s693 = scalar_lea.sflag [#allocation5], %s692
          %s694 = sand.u32 %s170, 1
          %s695 = smul.addr %s694, 24
          %s696 = scalar_lea.vmem [#allocation4], %s695
          %698 = dma.done %s693, 384
        $region56: #{tpu_custom_call.1} parent=47 // pred_fallthru
          _
      $region48: #{tpu_custom_call.1} parent=5 // pred_fallthru
        _
    $region6: #{tpu_custom_call.1} parent=1 // loop_footer
      %s22 = sadd.s32 1, %s18
    $region7: #{tpu_custom_call.1} parent=1 // loop_footer_branch
      %17 = sbr.rel target = $region3
    $region8: #{tpu_custom_call.1} parent=1 // loop_exit
      _
    %699 = vsyncpa [#allocation3], 1
    %s700 = scalar_lea.sflag [#allocation3], 1
    %701 = vsyncpa %s700, 1
    %702 = vsyncpa [#allocation5], 1
    %s703 = scalar_lea.sflag [#allocation5], 1
    %704 = vsyncpa %s703, 1

</llo_original>
